<compile_context>
chip_gen: v6e
topology: v6e:2x2x1
jax: 0.10.0
libtpu: 0.0.40
codegen_flags: <defaults>
</compile_context>

<pallas_src>
import math

import jax
import jax.numpy as jnp
from jax.experimental import pallas as pl
from jax.experimental.pallas import tpu as pltpu


# --------------------------------------------------------------------------
# Kernels
# --------------------------------------------------------------------------
def _multiple_linear_bias_kernel(x_ref, w_ref, b_ref, o_ref):
    # x_ref: (TL, TN, K), w_ref: (TL, K, Op), b_ref: (TL, 1, Op), o_ref: (TL, TN, Op)
    acc = jnp.einsum(
        "lnk,lko->lno", x_ref[...], w_ref[...],
        preferred_element_type=jnp.float32,
    )
    o_ref[...] = (acc + b_ref[...].astype(jnp.float32)).astype(o_ref.dtype)


def _multiple_linear_nobias_kernel(x_ref, w_ref, o_ref):
    o_ref[...] = jnp.einsum(
        "lnk,lko->lno", x_ref[...], w_ref[...],
        preferred_element_type=jnp.float32,
    ).astype(o_ref.dtype)


# --------------------------------------------------------------------------
# Tile selection helpers
# --------------------------------------------------------------------------
def _pick_row_tile(n, target=512):
    """Row (N) tile: full axis if small, else the largest divisor of n that is
    <= target and a multiple of 8 (sublane alignment). Falls back to full axis."""
    if n <= target:
        return n
    for d in range(target, 0, -1):
        if n % d == 0 and d % 8 == 0:
            return d
    return n


def _pick_linear_tile(num_linear, tn, k, o_pad, itemsize, budget_bytes):
    """Largest divisor of num_linear whose double-buffered tile footprint fits
    the VMEM budget (x + weight + bias + out per step, x2 for pipelining)."""
    for tl in range(num_linear, 0, -1):
        if num_linear % tl:
            continue
        footprint = 2 * itemsize * tl * (tn * k + k * o_pad + o_pad + tn * o_pad)
        if footprint <= budget_bytes:
            return tl
    return 1


def _round_up(x, m):
    return x if x % m == 0 else ((x // m) + 1) * m


# --------------------------------------------------------------------------
# Wrapper
# --------------------------------------------------------------------------
def multiple_linear(x, weight, bias=None, *, row_tile_target=512,
                    vmem_tile_budget_bytes=12 * 1024 * 1024,
                    compute_dtype=None):
    """x: (L, N, K), weight: (L, K, O), bias: (L, O) or None -> (L, N, O).

    compute_dtype: optionally cast x/weight (e.g. jnp.bfloat16) for the MXU on
    v6e/v7x; accumulation stays in f32 and output keeps x's original dtype.
    """
    out_dtype = x.dtype
    L, N, K = x.shape
    Lw, Kw, O = weight.shape
    assert (Lw, Kw) == (L, K), "weight shape must be (num_linear, in_fea_len, out_fea_len)"

    if compute_dtype is not None:
        x = x.astype(compute_dtype)
        weight = weight.astype(compute_dtype)

    # Lane-dense output: pad the output feature dim to a multiple of 128 with
    # exact zeros; the padded columns are sliced off after the kernel.
    # TODO(synk): K could similarly be padded to 128 for denser MXU lane feed,
    # at the cost of extra x/weight HBM traffic — shape dependent, left off.
    Op = _round_up(O, 128)
    if Op != O:
        weight = jnp.pad(weight, ((0, 0), (0, 0), (0, Op - O)))

    # Sublane-dense rows: pad N up to a multiple of 8 (exact zeros, sliced off).
    Np = _round_up(N, 8)
    if Np != N:
        x = jnp.pad(x, ((0, 0), (0, Np - N), (0, 0)))

    use_bias = bias is not None
    if use_bias:
        bias3 = bias.reshape(L, 1, O).astype(out_dtype)
        if Op != O:
            bias3 = jnp.pad(bias3, ((0, 0), (0, 0), (0, Op - O)))

    itemsize = jnp.dtype(x.dtype).itemsize
    tn = _pick_row_tile(Np, row_tile_target)
    tl = _pick_linear_tile(L, tn, K, Op, itemsize, vmem_tile_budget_bytes)
    grid = (L // tl, Np // tn)

    x_spec = pl.BlockSpec((tl, tn, K), lambda l, n: (l, n, 0))
    # Weight / bias blocks depend only on l: they stay VMEM-resident while the
    # row tiles of x / out stream along the inner n axis.
    w_spec = pl.BlockSpec((tl, K, Op), lambda l, n: (l, 0, 0))
    o_spec = pl.BlockSpec((tl, tn, Op), lambda l, n: (l, n, 0))

    bytes_accessed = itemsize * (L * Np * K + L * K * Op + L * Np * Op)
    if use_bias:
        bytes_accessed += jnp.dtype(out_dtype).itemsize * L * Op
    cost = pl.CostEstimate(
        flops=2 * L * Np * K * Op,
        transcendentals=0,
        bytes_accessed=bytes_accessed,
    )
    cparams = pltpu.CompilerParams(
        # Both axes write independent output tiles -> both parallel (v7x: the
        # two TensorCores split the grid whenever its extent is >= 2).
        dimension_semantics=("parallel", "parallel"),
        vmem_limit_bytes=32 * 1024 * 1024,
    )

    if use_bias:
        b_spec = pl.BlockSpec((tl, 1, Op), lambda l, n: (l, 0, 0))
        out = pl.pallas_call(
            _multiple_linear_bias_kernel,
            out_shape=jax.ShapeDtypeStruct((L, Np, Op), out_dtype),
            grid=grid,
            in_specs=[x_spec, w_spec, b_spec],
            out_specs=o_spec,
            compiler_params=cparams,
            cost_estimate=cost,
        )(x, weight, bias3)
    else:
        out = pl.pallas_call(
            _multiple_linear_nobias_kernel,
            out_shape=jax.ShapeDtypeStruct((L, Np, Op), out_dtype),
            grid=grid,
            in_specs=[x_spec, w_spec],
            out_specs=o_spec,
            compiler_params=cparams,
            cost_estimate=cost,
        )(x, weight)

    if Np != N or Op != O:
        out = out[:, :N, :O]
    return out


# --------------------------------------------------------------------------
# Parameter init (matches MultipleLinear.reset_parameters) + reference
# --------------------------------------------------------------------------
def init_params(key, num_linear, in_fea_len, out_fea_len, bias=True, dtype=jnp.float32):
    kw, kb = jax.random.split(key)
    # kaiming_uniform_(a=sqrt(5)) -> bound = 1/sqrt(fan_in); torch fan_in for a
    # 3-D parameter is size(1) * prod(size(2:)) = in_fea_len * out_fea_len.
    fan_in = in_fea_len * out_fea_len
    w_bound = 1.0 / math.sqrt(fan_in)
    weight = jax.random.uniform(
        kw, (num_linear, in_fea_len, out_fea_len), dtype=dtype,
        minval=-w_bound, maxval=w_bound)
    if bias:
        b_bound = 1.0 / math.sqrt(fan_in)
        b = jax.random.uniform(
            kb, (num_linear, out_fea_len), dtype=dtype,
            minval=-b_bound, maxval=b_bound)
    else:
        b = None
    return weight, b


def reference(x, weight, bias):
    out = jnp.einsum("lnk,lko->lno", x, weight)
    if bias is not None:
        out = out + bias[:, None, :]
    return out


if __name__ == "__main__":
    key = jax.random.PRNGKey(0)
    k_x, k_p, k_x2 = jax.random.split(key, 3)

    num_linear = 4
    n_rows = 8          # "batch" rows per linear
    in_fea_len = 32
    out_fea_len = 16

    x = jax.random.normal(k_x, (num_linear, n_rows, in_fea_len), dtype=jnp.float32)
    # batch_edge is accepted by the PyTorch forward but never used; placeholder only.
    batch_edge = jnp.zeros((n_rows,), dtype=jnp.int32)  # unused

    weight, bias = init_params(k_p, num_linear, in_fea_len, out_fea_len, bias=True)

    out = multiple_linear(x, weight, bias)
    out = jax.block_until_ready(out)
    ref = reference(x, weight, bias)
    assert out.shape == (num_linear, n_rows, out_fea_len)
    assert jnp.allclose(out, ref, atol=1e-5, rtol=1e-5), "mismatch vs reference (bias)"

    # Exercise the dedicated no-bias kernel variant too.
    out_nb = jax.block_until_ready(multiple_linear(x, weight, None))
    ref_nb = reference(x, weight, None)
    assert jnp.allclose(out_nb, ref_nb, atol=1e-5, rtol=1e-5), "mismatch vs reference (no bias)"

    # Exercise the ragged-row padding path (N not a multiple of 8).
    x_odd = jax.random.normal(k_x2, (num_linear, 10, in_fea_len), dtype=jnp.float32)
    out_odd = jax.block_until_ready(multiple_linear(x_odd, weight, bias))
    ref_odd = reference(x_odd, weight, bias)
    assert out_odd.shape == (num_linear, 10, out_fea_len)
    assert jnp.allclose(out_odd, ref_odd, atol=1e-5, rtol=1e-5), "mismatch vs reference (ragged N)"

    print("KERNEL_OK")
</pallas_src>

<mosaic_0001>
module attributes {stable_mosaic.version = 11 : i64} {
  func.func @_multiple_linear_bias_kernel(%arg0: i32, %arg1: i32, %arg2: memref<4x8x32xf32, #tpu.memory_space<vmem>>, %arg3: memref<4x32x128xf32, #tpu.memory_space<vmem>>, %arg4: memref<4x1x128xf32, #tpu.memory_space<vmem>>, %arg5: memref<4x8x128xf32, #tpu.memory_space<vmem>>) attributes {dimension_semantics = [#tpu.dimension_semantics<parallel>, #tpu.dimension_semantics<parallel>], iteration_bounds = array<i64: 1, 1>, scalar_prefetch = 0 : i64, scratch_operands = 0 : i64, tpu.core_type = #tpu.core_type<tc>, window_params = [{transform_indices = @transform_0, window_bounds = array<i64: 4, 8, 32>}, {transform_indices = @transform_1, window_bounds = array<i64: 4, 32, 128>}, {transform_indices = @transform_2, window_bounds = array<i64: 4, 1, 128>}, {transform_indices = @transform_3, window_bounds = array<i64: 4, 8, 128>}]} {
    %c0 = arith.constant 0 : index
    %c0_0 = arith.constant 0 : index
    %c0_1 = arith.constant 0 : index
    %0 = vector.load %arg2[%c0, %c0_0, %c0_1] : memref<4x8x32xf32, #tpu.memory_space<vmem>>, vector<4x8x32xf32>
    %c0_2 = arith.constant 0 : index
    %c0_3 = arith.constant 0 : index
    %c0_4 = arith.constant 0 : index
    %1 = vector.load %arg3[%c0_2, %c0_3, %c0_4] : memref<4x32x128xf32, #tpu.memory_space<vmem>>, vector<4x32x128xf32>
    "tpu.trace_start"() <{level = 10 : i32, message = "lnk,lko->lno"}> : () -> ()
    %cst = arith.constant dense<0.000000e+00> : vector<4x8x128xf32>
    %2 = tpu.matmul %0, %1, %cst {dimension_numbers = #tpu.dot_dimension_numbers<[2], [1], [1], [2], [0, 0, 0, 1, 1, 2], [0], [0]>} : vector<4x8x32xf32>, vector<4x32x128xf32>, vector<4x8x128xf32> -> vector<4x8x128xf32>
    "tpu.trace_stop"() : () -> ()
    %c0_5 = arith.constant 0 : index
    %c0_6 = arith.constant 0 : index
    %c0_7 = arith.constant 0 : index
    %3 = vector.load %arg4[%c0_5, %c0_6, %c0_7] : memref<4x1x128xf32, #tpu.memory_space<vmem>>, vector<4x1x128xf32>
    %4 = vector.broadcast %3 : vector<4x1x128xf32> to vector<4x8x128xf32>
    %5 = arith.addf %2, %4 : vector<4x8x128xf32>
    %c0_8 = arith.constant 0 : index
    %c0_9 = arith.constant 0 : index
    %c0_10 = arith.constant 0 : index
    %6 = vector.load %arg5[%c0_8, %c0_9, %c0_10] : memref<4x8x128xf32, #tpu.memory_space<vmem>>, vector<4x8x128xf32>
    tpu.vector_store %arg5[%c0_8, %c0_9, %c0_10], %5 {strides = array<i32>} : memref<4x8x128xf32, #tpu.memory_space<vmem>>, vector<4x8x128xf32>,
    return
  }
  func.func @transform_0(%arg0: i32, %arg1: i32) -> (i32, i32, i32) {
    %c0_i32 = arith.constant 0 : i32
    %c0_i32_0 = arith.constant 0 : i32
    return %arg0, %arg1, %c0_i32 : i32, i32, i32
  }
  func.func @transform_1(%arg0: i32, %arg1: i32) -> (i32, i32, i32) {
    %c0_i32 = arith.constant 0 : i32
    %c0_i32_0 = arith.constant 0 : i32
    %c0_i32_1 = arith.constant 0 : i32
    return %arg0, %c0_i32, %c0_i32_0 : i32, i32, i32
  }
  func.func @transform_2(%arg0: i32, %arg1: i32) -> (i32, i32, i32) {
    %c0_i32 = arith.constant 0 : i32
    %c0_i32_0 = arith.constant 0 : i32
    %c0_i32_1 = arith.constant 0 : i32
    return %arg0, %c0_i32, %c0_i32_0 : i32, i32, i32
  }
  func.func @transform_3(%arg0: i32, %arg1: i32) -> (i32, i32, i32) {
    %c0_i32 = arith.constant 0 : i32
    %c0_i32_0 = arith.constant 0 : i32
    return %arg0, %arg1, %c0_i32 : i32, i32, i32
  }
}

</mosaic_0001>

<llo_original>
// kernel: tpu_custom_call.1
$region0: #{tpu_custom_call.1}
  #allocation0 [shape = 'u32[]', space=smem, size = 0x4, offset = 0x4, fixed_abs, tag = 'smem constant byte address 0x4 - core index']
  #allocation1 [shape = 'u32[144,128]{1,0:T(1,128)}', space=vmem, size = 0x12000, scoped, tag = 'internal scratch']
  %s0 = inlined_call_operand.hbm [shape: f32[4,8,32], index: 0, kind: input, shape index: {}]
  %s1 = inlined_call_operand.hbm [shape: f32[4,32,128], index: 1, kind: input, shape index: {}]
  %s2 = inlined_call_operand.hbm [shape: f32[4,1,128], index: 2, kind: input, shape index: {}]
  %s3 = inlined_call_operand.hbm [shape: f32[4,8,128], index: 3, kind: output, shape index: {}]
  %s4 = sld [smem:[#allocation0]]
  $region34: #{tpu_custom_call.1} parent=0
    _
  %s6 = ssub.s32 1, %s4
  %s7 = scalar_select 0, %s6, %s4
  $region1: #{tpu_custom_call.1} parent=0
    #allocation2 [shape = 'u8[16384]{0}', space=vmem, size = 0x4000, scoped, tag = 'input window, operand 0, single buffered']
    #allocation3 [shape = 's32[1]{0}', space=sflag, size = 0x4, scoped, tag = 'scoped memory for tpu_custom_call.1']
    #allocation4 [shape = 's32[1]{0}', space=sflag, size = 0x4, scoped, tag = 'scoped memory for tpu_custom_call.1']
    #allocation5 [shape = 'u8[65536]{0}', space=vmem, size = 0x10000, scoped, tag = 'input window, operand 1, single buffered']
    #allocation6 [shape = 's32[1]{0}', space=sflag, size = 0x4, scoped, tag = 'scoped memory for tpu_custom_call.1']
    #allocation7 [shape = 'u8[2048]{0}', space=vmem, size = 0x800, scoped, tag = 'input window, operand 2, single buffered']
    #allocation8 [shape = 'u8[16384]{0}', space=vmem, size = 0x4000, scoped, tag = 'output window, operand 0, single buffered']
    %8 = vsyncpa [#allocation3], 0
    %9 = vsyncpa [#allocation6], 0
    %10 = vsyncpa [#allocation4], 0
    // Predicated region
    $region2: #{tpu_custom_call.1} parent=1 // pred_check
      _
    $region3: #{tpu_custom_call.1} parent=1 // pred_check_branch
      %12 = sbr.rel (0) target = $region5
    $region4: #{tpu_custom_call.1} parent=1 // pred_region
      %s14 = ssub.s32 512, 512
      %15 = vsyncadd [#allocation3], %s14
      %s16 = sshll.u32 [#allocation2], 4
      %s17 = int_to_ptr.vmem [resolvable:$true] %s16
      %22 = dma.hbm_to_vmem [thread:$0]  %s0, 512, %s17, [#allocation3], 128, 128, 8
    $region5: #{tpu_custom_call.1} parent=1 // pred_fallthru
      _
    // Predicated region
    $region6: #{tpu_custom_call.1} parent=1 // pred_check
      _
    $region7: #{tpu_custom_call.1} parent=1 // pred_check_branch
      %24 = sbr.rel (0) target = $region9
    $region8: #{tpu_custom_call.1} parent=1 // pred_region
      %s26 = ssub.s32 2048, 2048
      %27 = vsyncadd [#allocation6], %s26
      %s28 = sshll.u32 [#allocation5], 4
      %s29 = int_to_ptr.vmem [resolvable:$true] %s28
      %34 = dma.hbm_to_vmem [thread:$0]  %s1, 2048, %s29, [#allocation6], 128, 128, 8
    $region9: #{tpu_custom_call.1} parent=1 // pred_fallthru
      _
    // Predicated region
    $region10: #{tpu_custom_call.1} parent=1 // pred_check
      _
    $region11: #{tpu_custom_call.1} parent=1 // pred_check_branch
      %36 = sbr.rel (0) target = $region13
    $region12: #{tpu_custom_call.1} parent=1 // pred_region
      %s38 = ssub.s32 64, 64
      %39 = vsyncadd [#allocation6], %s38
      %s40 = sshll.u32 [#allocation7], 4
      %s41 = int_to_ptr.vmem [resolvable:$true] %s40
      %46 = dma.hbm_to_vmem [thread:$0]  %s2, 64, %s41, [#allocation6], 16, 16, 1
    $region13: #{tpu_custom_call.1} parent=1 // pred_fallthru
      _
    // Predicated region
    $region14: #{tpu_custom_call.1} parent=1 // pred_check
      _
    $region15: #{tpu_custom_call.1} parent=1 // pred_check_branch
      %48 = sbr.rel (0) target = $region17
    $region16: #{tpu_custom_call.1} parent=1 // pred_region
      %49 = dma.done [#allocation3], 512
    $region17: #{tpu_custom_call.1} parent=1 // pred_fallthru
      _
    // Predicated region
    $region18: #{tpu_custom_call.1} parent=1 // pred_check
      _
    $region19: #{tpu_custom_call.1} parent=1 // pred_check_branch
      %51 = sbr.rel (0) target = $region21
    $region20: #{tpu_custom_call.1} parent=1 // pred_region
      %52 = dma.done [#allocation6], 2048
    $region21: #{tpu_custom_call.1} parent=1 // pred_fallthru
      _
    // Predicated region
    $region22: #{tpu_custom_call.1} parent=1 // pred_check
      _
    $region23: #{tpu_custom_call.1} parent=1 // pred_check_branch
      %54 = sbr.rel (0) target = $region25
    $region24: #{tpu_custom_call.1} parent=1 // pred_region
      %55 = dma.done [#allocation6], 64
    $region25: #{tpu_custom_call.1} parent=1 // pred_fallthru
      _
    %v56 = vld [vmem:[#allocation2] sm:$0xff]
    %v57 = vld [vmem:[#allocation2 + $0x8] sm:$0xff]
    %v58 = vld [vmem:[#allocation2 + $0x10] sm:$0xff]
    %v59 = vld [vmem:[#allocation2 + $0x18] sm:$0xff]
    %v60 = vld [vmem:[#allocation5] sm:$0xff]
    %v61 = vld [vmem:[#allocation5 + $0x8] sm:$0xff]
    %v62 = vld [vmem:[#allocation5 + $0x10] sm:$0xff]
    %v63 = vld [vmem:[#allocation5 + $0x18] sm:$0xff]
    %v64 = vld [vmem:[#allocation5 + $0x20] sm:$0xff]
    %v65 = vld [vmem:[#allocation5 + $0x28] sm:$0xff]
    %v66 = vld [vmem:[#allocation5 + $0x30] sm:$0xff]
    %v67 = vld [vmem:[#allocation5 + $0x38] sm:$0xff]
    %v68 = vld [vmem:[#allocation5 + $0x40] sm:$0xff]
    %v69 = vld [vmem:[#allocation5 + $0x48] sm:$0xff]
    %v70 = vld [vmem:[#allocation5 + $0x50] sm:$0xff]
    %v71 = vld [vmem:[#allocation5 + $0x58] sm:$0xff]
    %v72 = vld [vmem:[#allocation5 + $0x60] sm:$0xff]
    %v73 = vld [vmem:[#allocation5 + $0x68] sm:$0xff]
    %v74 = vld [vmem:[#allocation5 + $0x70] sm:$0xff]
    %v75 = vld [vmem:[#allocation5 + $0x78] sm:$0xff]
    %v76 = vld [vmem:[#allocation7] sm:$0x1]
    %v77 = vld [vmem:[#allocation7 + $0x1] sm:$0x1]
    %v78 = vld [vmem:[#allocation7 + $0x2] sm:$0x1]
    %v79 = vld [vmem:[#allocation7 + $0x3] sm:$0x1]
    %v84 = vlaneseq
    %v85 = vshrl.u32 %v84, 7
    %v86 = vsub.s32 0, %v85
    %v87 = vrot.slane %v76, %v86
    %v88 = vlaneseq
    %v89 = vshrl.u32 %v88, 7
    %v90 = vsub.s32 0, %v89
    %v91 = vrot.slane %v77, %v90
    %v92 = vlaneseq
    %v93 = vshrl.u32 %v92, 7
    %v94 = vsub.s32 0, %v93
    %v95 = vrot.slane %v78, %v94
    %v96 = vlaneseq
    %v97 = vshrl.u32 %v96, 7
    %v98 = vsub.s32 0, %v97
    %v99 = vrot.slane %v79, %v98
    %vm104 = vcmask 261120
    %v106 = vsel %vm104, %v56, 0
    %108 = vmatprep.subr.mxu0 0.0
    %109 = vmatpush1.msra.mxu0 0.0
    %110 = vmatprep.subr.mxu0 0.0
    %111 = vmatpush1.msra.mxu0 0.0
    %112 = vmatprep.subr.mxu0 0.0
    %113 = vmatpush1.msra.mxu0 0.0
    %114 = vmatprep.subr.mxu0 0.0
    %115 = vmatpush1.msra.mxu0 0.0
    %116 = vmatprep.subr.mxu0 0.0
    %117 = vmatpush1.msra.mxu0 0.0
    %118 = vmatprep.subr.mxu0 0.0
    %119 = vmatpush1.msra.mxu0 0.0
    %120 = vmatprep.subr.mxu0 0.0
    %121 = vmatpush1.msra.mxu0 0.0
    %122 = vmatprep.subr.mxu0 0.0
    %123 = vmatpush1.msra.mxu0 0.0
    %124 = vmatprep.subr.mxu0 0.0
    %125 = vmatpush1.msra.mxu0 0.0
    %126 = vmatprep.subr.mxu0 0.0
    %127 = vmatpush1.msra.mxu0 0.0
    %128 = vmatprep.subr.mxu0 0.0
    %129 = vmatpush1.msra.mxu0 0.0
    %130 = vmatprep.subr.mxu0 0.0
    %131 = vmatpush1.msra.mxu0 0.0
    %132 = vmatprep.subr.mxu0 0.0
    %133 = vmatpush1.msra.mxu0 %v63
    %134 = vmatprep.subr.mxu0 0.0
    %135 = vmatpush1.msra.mxu0 %v62
    %136 = vmatprep.subr.mxu0 0.0
    %137 = vmatpush1.msra.mxu0 %v61
    %138 = vmatprep.subr.mxu0 0.0
    %139 = vmatpush1.msra.mxu0 %v60
    %140 = vmatprep.subr.mxu0 0.0
    %141 = vmatpush2.msra.mxu0 0.0
    %142 = vmatprep.subr.mxu0 0.0
    %143 = vmatpush2.msra.mxu0 0.0
    %144 = vmatprep.subr.mxu0 0.0
    %145 = vmatpush2.msra.mxu0 0.0
    %146 = vmatprep.subr.mxu0 0.0
    %147 = vmatpush2.msra.mxu0 0.0
    %148 = vmatprep.subr.mxu0 0.0
    %149 = vmatpush2.msra.mxu0 0.0
    %150 = vmatprep.subr.mxu0 0.0
    %151 = vmatpush2.msra.mxu0 0.0
    %152 = vmatprep.subr.mxu0 0.0
    %153 = vmatpush2.msra.mxu0 0.0
    %154 = vmatprep.subr.mxu0 0.0
    %155 = vmatpush2.msra.mxu0 0.0
    %156 = vmatprep.subr.mxu0 0.0
    %157 = vmatpush2.msra.mxu0 0.0
    %158 = vmatprep.subr.mxu0 0.0
    %159 = vmatpush2.msra.mxu0 0.0
    %160 = vmatprep.subr.mxu0 0.0
    %161 = vmatpush2.msra.mxu0 0.0
    %162 = vmatprep.subr.mxu0 0.0
    %163 = vmatpush2.msra.mxu0 0.0
    %164 = vmatprep.subr.mxu0 0.0
    %165 = vmatpush2.msra.mxu0 0.0
    %166 = vmatprep.subr.mxu0 0.0
    %167 = vmatpush2.msra.mxu0 0.0
    %168 = vmatprep.subr.mxu0 0.0
    %169 = vmatpush2.msra.mxu0 0.0
    %170 = vmatprep.subr.mxu0 0.0
    %171 = vmatpush2.msra.mxu0 0.0
    %172 = vmatprep.mubr.f32.mxu0 0.0
    %173 = vmatmul.mubr.f32.gmra.mxu0 %v106
    %v174 = vpop.f32.mrf.mxu0
    %v175 = vadd.f32 %v87, %v174
    %v176 = vpop.f32.mrf.mxu0
    %177 = vdwg.mxu0
    %v179 = vsel %vm104, %v57, 0
    %181 = vmatprep.subr.mxu0 0.0
    %182 = vmatpush1.msra.mxu0 0.0
    %183 = vmatprep.subr.mxu0 0.0
    %184 = vmatpush1.msra.mxu0 0.0
    %185 = vmatprep.subr.mxu0 0.0
    %186 = vmatpush1.msra.mxu0 0.0
    %187 = vmatprep.subr.mxu0 0.0
    %188 = vmatpush1.msra.mxu0 0.0
    %189 = vmatprep.subr.mxu0 0.0
    %190 = vmatpush1.msra.mxu0 0.0
    %191 = vmatprep.subr.mxu0 0.0
    %192 = vmatpush1.msra.mxu0 0.0
    %193 = vmatprep.subr.mxu0 0.0
    %194 = vmatpush1.msra.mxu0 0.0
    %195 = vmatprep.subr.mxu0 0.0
    %196 = vmatpush1.msra.mxu0 0.0
    %197 = vmatprep.subr.mxu0 0.0
    %198 = vmatpush1.msra.mxu0 0.0
    %199 = vmatprep.subr.mxu0 0.0
    %200 = vmatpush1.msra.mxu0 0.0
    %201 = vmatprep.subr.mxu0 0.0
    %202 = vmatpush1.msra.mxu0 0.0
    %203 = vmatprep.subr.mxu0 0.0
    %204 = vmatpush1.msra.mxu0 0.0
    %205 = vmatprep.subr.mxu0 0.0
    %206 = vmatpush1.msra.mxu0 %v67
    %207 = vmatprep.subr.mxu0 0.0
    %208 = vmatpush1.msra.mxu0 %v66
    %209 = vmatprep.subr.mxu0 0.0
    %210 = vmatpush1.msra.mxu0 %v65
    %211 = vmatprep.subr.mxu0 0.0
    %212 = vmatpush1.msra.mxu0 %v64
    %213 = vmatprep.subr.mxu0 0.0
    %214 = vmatpush2.msra.mxu0 0.0
    %215 = vmatprep.subr.mxu0 0.0
    %216 = vmatpush2.msra.mxu0 0.0
    %217 = vmatprep.subr.mxu0 0.0
    %218 = vmatpush2.msra.mxu0 0.0
    %219 = vmatprep.subr.mxu0 0.0
    %220 = vmatpush2.msra.mxu0 0.0
    %221 = vmatprep.subr.mxu0 0.0
    %222 = vmatpush2.msra.mxu0 0.0
    %223 = vmatprep.subr.mxu0 0.0
    %224 = vmatpush2.msra.mxu0 0.0
    %225 = vmatprep.subr.mxu0 0.0
    %226 = vmatpush2.msra.mxu0 0.0
    %227 = vmatprep.subr.mxu0 0.0
    %228 = vmatpush2.msra.mxu0 0.0
    %229 = vmatprep.subr.mxu0 0.0
    %230 = vmatpush2.msra.mxu0 0.0
    %231 = vmatprep.subr.mxu0 0.0
    %232 = vmatpush2.msra.mxu0 0.0
    %233 = vmatprep.subr.mxu0 0.0
    %234 = vmatpush2.msra.mxu0 0.0
    %235 = vmatprep.subr.mxu0 0.0
    %236 = vmatpush2.msra.mxu0 0.0
    %237 = vmatprep.subr.mxu0 0.0
    %238 = vmatpush2.msra.mxu0 0.0
    %239 = vmatprep.subr.mxu0 0.0
    %240 = vmatpush2.msra.mxu0 0.0
    %241 = vmatprep.subr.mxu0 0.0
    %242 = vmatpush2.msra.mxu0 0.0
    %243 = vmatprep.subr.mxu0 0.0
    %244 = vmatpush2.msra.mxu0 0.0
    %245 = vmatprep.mubr.f32.mxu0 0.0
    %246 = vmatmul.mubr.f32.gmra.mxu0 %v179
    %v247 = vpop.f32.mrf.mxu0
    %v248 = vadd.f32 %v91, %v247
    %v249 = vpop.f32.mrf.mxu0
    %250 = vdwg.mxu0
    %v252 = vsel %vm104, %v58, 0
    %254 = vmatprep.subr.mxu0 0.0
    %255 = vmatpush1.msra.mxu0 0.0
    %256 = vmatprep.subr.mxu0 0.0
    %257 = vmatpush1.msra.mxu0 0.0
    %258 = vmatprep.subr.mxu0 0.0
    %259 = vmatpush1.msra.mxu0 0.0
    %260 = vmatprep.subr.mxu0 0.0
    %261 = vmatpush1.msra.mxu0 0.0
    %262 = vmatprep.subr.mxu0 0.0
    %263 = vmatpush1.msra.mxu0 0.0
    %264 = vmatprep.subr.mxu0 0.0
    %265 = vmatpush1.msra.mxu0 0.0
    %266 = vmatprep.subr.mxu0 0.0
    %267 = vmatpush1.msra.mxu0 0.0
    %268 = vmatprep.subr.mxu0 0.0
    %269 = vmatpush1.msra.mxu0 0.0
    %270 = vmatprep.subr.mxu0 0.0
    %271 = vmatpush1.msra.mxu0 0.0
    %272 = vmatprep.subr.mxu0 0.0
    %273 = vmatpush1.msra.mxu0 0.0
    %274 = vmatprep.subr.mxu0 0.0
    %275 = vmatpush1.msra.mxu0 0.0
    %276 = vmatprep.subr.mxu0 0.0
    %277 = vmatpush1.msra.mxu0 0.0
    %278 = vmatprep.subr.mxu0 0.0
    %279 = vmatpush1.msra.mxu0 %v71
    %280 = vmatprep.subr.mxu0 0.0
    %281 = vmatpush1.msra.mxu0 %v70
    %282 = vmatprep.subr.mxu0 0.0
    %283 = vmatpush1.msra.mxu0 %v69
    %284 = vmatprep.subr.mxu0 0.0
    %285 = vmatpush1.msra.mxu0 %v68
    %286 = vmatprep.subr.mxu0 0.0
    %287 = vmatpush2.msra.mxu0 0.0
    %288 = vmatprep.subr.mxu0 0.0
    %289 = vmatpush2.msra.mxu0 0.0
    %290 = vmatprep.subr.mxu0 0.0
    %291 = vmatpush2.msra.mxu0 0.0
    %292 = vmatprep.subr.mxu0 0.0
    %293 = vmatpush2.msra.mxu0 0.0
    %294 = vmatprep.subr.mxu0 0.0
    %295 = vmatpush2.msra.mxu0 0.0
    %296 = vmatprep.subr.mxu0 0.0
    %297 = vmatpush2.msra.mxu0 0.0
    %298 = vmatprep.subr.mxu0 0.0
    %299 = vmatpush2.msra.mxu0 0.0
    %300 = vmatprep.subr.mxu0 0.0
    %301 = vmatpush2.msra.mxu0 0.0
    %302 = vmatprep.subr.mxu0 0.0
    %303 = vmatpush2.msra.mxu0 0.0
    %304 = vmatprep.subr.mxu0 0.0
    %305 = vmatpush2.msra.mxu0 0.0
    %306 = vmatprep.subr.mxu0 0.0
    %307 = vmatpush2.msra.mxu0 0.0
    %308 = vmatprep.subr.mxu0 0.0
    %309 = vmatpush2.msra.mxu0 0.0
    %310 = vmatprep.subr.mxu0 0.0
    %311 = vmatpush2.msra.mxu0 0.0
    %312 = vmatprep.subr.mxu0 0.0
    %313 = vmatpush2.msra.mxu0 0.0
    %314 = vmatprep.subr.mxu0 0.0
    %315 = vmatpush2.msra.mxu0 0.0
    %316 = vmatprep.subr.mxu0 0.0
    %317 = vmatpush2.msra.mxu0 0.0
    %318 = vmatprep.mubr.f32.mxu0 0.0
    %319 = vmatmul.mubr.f32.gmra.mxu0 %v252
    %v320 = vpop.f32.mrf.mxu0
    %v321 = vadd.f32 %v95, %v320
    %v322 = vpop.f32.mrf.mxu0
    %323 = vdwg.mxu0
    %v325 = vsel %vm104, %v59, 0
    %327 = vmatprep.subr.mxu0 0.0
    %328 = vmatpush1.msra.mxu0 0.0
    %329 = vmatprep.subr.mxu0 0.0
    %330 = vmatpush1.msra.mxu0 0.0
    %331 = vmatprep.subr.mxu0 0.0
    %332 = vmatpush1.msra.mxu0 0.0
    %333 = vmatprep.subr.mxu0 0.0
    %334 = vmatpush1.msra.mxu0 0.0
    %335 = vmatprep.subr.mxu0 0.0
    %336 = vmatpush1.msra.mxu0 0.0
    %337 = vmatprep.subr.mxu0 0.0
    %338 = vmatpush1.msra.mxu0 0.0
    %339 = vmatprep.subr.mxu0 0.0
    %340 = vmatpush1.msra.mxu0 0.0
    %341 = vmatprep.subr.mxu0 0.0
    %342 = vmatpush1.msra.mxu0 0.0
    %343 = vmatprep.subr.mxu0 0.0
    %344 = vmatpush1.msra.mxu0 0.0
    %345 = vmatprep.subr.mxu0 0.0
    %346 = vmatpush1.msra.mxu0 0.0
    %347 = vmatprep.subr.mxu0 0.0
    %348 = vmatpush1.msra.mxu0 0.0
    %349 = vmatprep.subr.mxu0 0.0
    %350 = vmatpush1.msra.mxu0 0.0
    %351 = vmatprep.subr.mxu0 0.0
    %352 = vmatpush1.msra.mxu0 %v75
    %353 = vmatprep.subr.mxu0 0.0
    %354 = vmatpush1.msra.mxu0 %v74
    %355 = vmatprep.subr.mxu0 0.0
    %356 = vmatpush1.msra.mxu0 %v73
    %357 = vmatprep.subr.mxu0 0.0
    %358 = vmatpush1.msra.mxu0 %v72
    %359 = vmatprep.subr.mxu0 0.0
    %360 = vmatpush2.msra.mxu0 0.0
    %361 = vmatprep.subr.mxu0 0.0
    %362 = vmatpush2.msra.mxu0 0.0
    %363 = vmatprep.subr.mxu0 0.0
    %364 = vmatpush2.msra.mxu0 0.0
    %365 = vmatprep.subr.mxu0 0.0
    %366 = vmatpush2.msra.mxu0 0.0
    %367 = vmatprep.subr.mxu0 0.0
    %368 = vmatpush2.msra.mxu0 0.0
    %369 = vmatprep.subr.mxu0 0.0
    %370 = vmatpush2.msra.mxu0 0.0
    %371 = vmatprep.subr.mxu0 0.0
    %372 = vmatpush2.msra.mxu0 0.0
    %373 = vmatprep.subr.mxu0 0.0
    %374 = vmatpush2.msra.mxu0 0.0
    %375 = vmatprep.subr.mxu0 0.0
    %376 = vmatpush2.msra.mxu0 0.0
    %377 = vmatprep.subr.mxu0 0.0
    %378 = vmatpush2.msra.mxu0 0.0
    %379 = vmatprep.subr.mxu0 0.0
    %380 = vmatpush2.msra.mxu0 0.0
    %381 = vmatprep.subr.mxu0 0.0
    %382 = vmatpush2.msra.mxu0 0.0
    %383 = vmatprep.subr.mxu0 0.0
    %384 = vmatpush2.msra.mxu0 0.0
    %385 = vmatprep.subr.mxu0 0.0
    %386 = vmatpush2.msra.mxu0 0.0
    %387 = vmatprep.subr.mxu0 0.0
    %388 = vmatpush2.msra.mxu0 0.0
    %389 = vmatprep.subr.mxu0 0.0
    %390 = vmatpush2.msra.mxu0 0.0
    %391 = vmatprep.mubr.f32.mxu0 0.0
    %392 = vmatmul.mubr.f32.gmra.mxu0 %v325
    %v393 = vpop.f32.mrf.mxu0
    %v394 = vadd.f32 %v99, %v393
    %v395 = vpop.f32.mrf.mxu0
    %396 = vdwg.mxu0
    %397 = vst [vmem:[#allocation8] sm:$0xff] %v175
    %398 = vst [vmem:[#allocation8 + $0x8] sm:$0xff] %v248
    %399 = vst [vmem:[#allocation8 + $0x10] sm:$0xff] %v321
    %400 = vst [vmem:[#allocation8 + $0x18] sm:$0xff] %v394
    // Predicated region
    $region26: #{tpu_custom_call.1} parent=1 // pred_check
      _
    $region27: #{tpu_custom_call.1} parent=1 // pred_check_branch
      %402 = sbr.rel (0) target = $region29
    $region28: #{tpu_custom_call.1} parent=1 // pred_region
      %s404 = ssub.s32 512, 512
      %405 = vsyncadd [#allocation4], %s404
      %s406 = sshll.u32 [#allocation8], 4
      %s407 = int_to_ptr.vmem [resolvable:$true] %s406
      %412 = dma.vmem_to_hbm [thread:$0]  %s407, 512, %s3, [#allocation4], 128, 128, 8
    $region29: #{tpu_custom_call.1} parent=1 // pred_fallthru
      _
    // Predicated region
    $region30: #{tpu_custom_call.1} parent=1 // pred_check
      _
    $region31: #{tpu_custom_call.1} parent=1 // pred_check_branch
      %414 = sbr.rel (0) target = $region33
    $region32: #{tpu_custom_call.1} parent=1 // pred_region
      %415 = dma.done [#allocation4], 512
    $region33: #{tpu_custom_call.1} parent=1 // pred_fallthru
      _
    %416 = vsyncpa [#allocation3], 1
    %417 = vsyncpa [#allocation6], 1
    %418 = vsyncpa [#allocation4], 1

</llo_original>
